<compile_context>
chip_gen: v7x
topology: tpu7x:2x2x1
jax: 0.10.0
libtpu: 0.0.40
codegen_flags: <defaults>
</compile_context>

<pallas_src>
import functools

import jax
import jax.numpy as jnp
import numpy as np
from jax.experimental import pallas as pl
from jax.experimental.pallas import tpu as pltpu


# ----------------------------- kernels --------------------------------------


def _pool_kernel(x_ref, xh_ref, xw_ref, *, inv_w, inv_h):
    # x_ref : (1, TH, W, C) one row tile of one batch element (NHWC, natural C)
    # xh_ref: (1, TH, C)    per-row mean over W (written every tile)
    # xw_ref: (1, W, C)     mean over H (accumulated across the H grid axis)
    h_idx = pl.program_id(1)
    x = x_ref[0]                                        # (TH, W, C)

    xh_ref[0] = jnp.sum(x, axis=1) * inv_w              # mean over W

    @pl.when(h_idx == 0)
    def _init():
        xw_ref[...] = jnp.zeros_like(xw_ref)

    xw_ref[0] += jnp.sum(x, axis=0)                     # partial sum over H

    @pl.when(h_idx == pl.num_programs(1) - 1)
    def _finalize():
        xw_ref[0] = xw_ref[0] * inv_h                   # finalize mean over H


def _gate_kernel(xh_ref, xw_ref, x_ref, w1_ref, b1_ref, w2_ref, b2_ref, o_ref,
                 *, matmul_dtype, approx_gate):
    # xh_ref: (1, TH, C)   x_w ref: (1, W, C)   x_ref/o_ref: (1, TH, W, C)
    # w1_ref: (C, mip) conv1 weights with BN1 scale folded, b1_ref: (1, mip)
    # w2_ref: (mip, C) conv2 weights,                        b2_ref: (1, C)
    th = xh_ref.shape[1]
    c = xh_ref.shape[2]
    w = xw_ref.shape[1]

    x_h = xh_ref[0]                                      # (TH, C)
    x_w = xw_ref[0]                                      # (W, C)

    # y = x_h * x_w, flattened to a 2D (rows, C) slab for the 1x1 convs.
    y = (x_h[:, None, :] * x_w[None, :, :]).reshape(th * w, c)
    y = y.astype(matmul_dtype)

    # conv1 (1x1) + folded BN1 + h-swish
    h1 = jnp.dot(y, w1_ref[...], preferred_element_type=jnp.float32) + b1_ref[0]
    h1 = h1 * (jnp.clip(h1 + 3.0, 0.0, 6.0) * (1.0 / 6.0))   # x * relu6(x+3)/6

    # conv2 (1x1) + logistic sigmoid gate
    a = jnp.dot(h1.astype(matmul_dtype), w2_ref[...],
                preferred_element_type=jnp.float32) + b2_ref[0]
    if approx_gate:
        gate = pl.reciprocal(1.0 + jnp.exp(-a), approx=True)   # divide on EUP slot
    else:
        gate = 1.0 / (1.0 + jnp.exp(-a))

    # Load the x tile only now (short live range; it already sits in VMEM).
    x_t = x_ref[0].reshape(th * w, c)
    o_ref[0] = (x_t * gate).reshape(th, w, c)


# ----------------------------- wrapper --------------------------------------


def _pick_row_tile(H, W, C, budget_bytes=1 << 20):
    """Largest divisor of H (multiple of 8, or H itself) whose f32 tile fits budget."""
    cands = sorted(d for d in range(1, H + 1)
                   if H % d == 0 and (d % 8 == 0 or d == H))
    fitting = [d for d in cands if d * W * C * 4 <= budget_bytes]
    return fitting[-1] if fitting else cands[0]


def coord_att_forward(x_nhwc, w1, b1, g1, be1, m1, v1, w2, b2, *,
                      eps=1e-5, row_tile=None,
                      matmul_dtype=jnp.float32, approx_gate=False):
    """CoordAtt forward on NHWC input (the kernel-native layout; callers using NCHW
    should transpose once at model boundaries rather than per-op).

    x_nhwc : (B, H, W, C) float32
    w1     : (mip, C, 1, 1), b1: (mip,)      conv1 weights / bias
    g1,be1,m1,v1 : (mip,)                    BN1 gamma/beta/mean/var (eval mode)
    w2     : (C, mip, 1, 1), b2: (C,)        conv2 weights / bias
    """
    B, H, W, C = x_nhwc.shape
    mip = w1.shape[0]
    assert w2.shape[0] == C, "identity * gate requires oup == inp"

    # ---- fold BN1 into conv1 (scale into weights, shift into bias) ----
    s1 = (g1 / jnp.sqrt(v1 + eps)).astype(jnp.float32)                 # (mip,)
    w1_eff = (w1[:, :, 0, 0].astype(jnp.float32) * s1[:, None]).T      # (C, mip)
    b1_eff = (b1.astype(jnp.float32) * s1 + (be1 - m1 * s1)).reshape(1, mip)
    w2_eff = w2[:, :, 0, 0].astype(jnp.float32).T                      # (mip, C)
    b2_eff = b2.astype(jnp.float32).reshape(1, C)

    w1_eff = w1_eff.astype(matmul_dtype)   # bf16 only touches the MXU operands;
    w2_eff = w2_eff.astype(matmul_dtype)   # accumulation stays f32.

    x_nhwc = x_nhwc.astype(jnp.float32)

    TH = row_tile if row_tile is not None else _pick_row_tile(H, W, C)
    assert H % TH == 0, "row tile must divide H"
    nH = H // TH

    cparams_pool = pltpu.CompilerParams(
        dimension_semantics=("parallel", "arbitrary"),
        vmem_limit_bytes=32 * 1024 * 1024)
    cparams_gate = pltpu.CompilerParams(
        dimension_semantics=("parallel", "parallel"),
        vmem_limit_bytes=32 * 1024 * 1024)

    # ---- pass 1: coordinate pooling -> x_h (B,H,C), x_w (B,W,C) ----
    xh, xw = pl.pallas_call(
        functools.partial(_pool_kernel, inv_w=1.0 / W, inv_h=1.0 / H),
        out_shape=(jax.ShapeDtypeStruct((B, H, C), jnp.float32),
                   jax.ShapeDtypeStruct((B, W, C), jnp.float32)),
        grid_spec=pltpu.PrefetchScalarGridSpec(
            num_scalar_prefetch=0,
            grid=(B, nH),
            in_specs=[pl.BlockSpec((1, TH, W, C), lambda b, h: (b, h, 0, 0))],
            out_specs=(pl.BlockSpec((1, TH, C), lambda b, h: (b, h, 0)),
                       pl.BlockSpec((1, W, C), lambda b, h: (b, 0, 0)))),
        compiler_params=cparams_pool,
    )(x_nhwc)

    # ---- pass 2: 1x1 convs + gate + multiply, streamed over row tiles ----
    # TODO(synk): if the x-tile DMA is still exposed at very small TH, add
    # pipeline_mode=pl.Buffered(3) to the x BlockSpec only.
    out = pl.pallas_call(
        functools.partial(_gate_kernel,
                          matmul_dtype=matmul_dtype, approx_gate=approx_gate),
        out_shape=jax.ShapeDtypeStruct((B, H, W, C), jnp.float32),
        grid_spec=pltpu.PrefetchScalarGridSpec(
            num_scalar_prefetch=0,
            grid=(B, nH),
            in_specs=[
                pl.BlockSpec((1, TH, C), lambda b, h: (b, h, 0)),        # x_h tile
                pl.BlockSpec((1, W, C), lambda b, h: (b, 0, 0)),         # x_w (full)
                pl.BlockSpec((1, TH, W, C), lambda b, h: (b, h, 0, 0)),  # x tile
                pl.BlockSpec((C, mip), lambda b, h: (0, 0)),             # w1 (folded)
                pl.BlockSpec((1, mip), lambda b, h: (0, 0)),             # b1 (folded)
                pl.BlockSpec((mip, C), lambda b, h: (0, 0)),             # w2
                pl.BlockSpec((1, C), lambda b, h: (0, 0)),               # b2
            ],
            out_specs=pl.BlockSpec((1, TH, W, C), lambda b, h: (b, h, 0, 0))),
        compiler_params=cparams_gate,
    )(xh, xw, x_nhwc, w1_eff, b1_eff, w2_eff, b2_eff)

    return out


# ----------------------------- reference & test ------------------------------


def _reference(x, w1, b1, g1, be1, m1, v1, w2, b2, eps=1e-5):
    """Pure-JAX NCHW reference mirroring the PyTorch module (eval-mode BN)."""
    x_h = jnp.mean(x, axis=3, keepdims=True)                     # (B,C,H,1)
    x_w = jnp.mean(x, axis=2, keepdims=True)                     # (B,C,1,W)
    y = x_h * x_w                                                # (B,C,H,W)
    y = jnp.einsum("bchw,mc->bmhw", y, w1[:, :, 0, 0]) + b1[None, :, None, None]
    y = (y - m1[None, :, None, None]) / jnp.sqrt(v1 + eps)[None, :, None, None] \
        * g1[None, :, None, None] + be1[None, :, None, None]
    y = y * jnp.clip(y + 3.0, 0.0, 6.0) / 6.0                    # h-swish
    y = jnp.einsum("bmhw,cm->bchw", y, w2[:, :, 0, 0]) + b2[None, :, None, None]
    gate = 1.0 / (1.0 + jnp.exp(-y))                             # logistic sigmoid
    return x * gate


if __name__ == "__main__":
    # Small shapes consistent with the module: inp = oup = 16, groups = 4
    # -> mip = max(8, 16 // 4) = 8; batch 2, spatial 16x16.
    B, C, H, W = 2, 16, 16, 16
    groups = 4
    mip = max(8, C // groups)

    key = jax.random.PRNGKey(0)
    ks = jax.random.split(key, 10)

    x_nchw = jax.random.normal(ks[0], (B, C, H, W), jnp.float32)

    w1 = jax.random.normal(ks[1], (mip, C, 1, 1), jnp.float32) * 0.2
    b1 = 0.1 * jax.random.normal(ks[2], (mip,), jnp.float32)
    g1 = 1.0 + 0.1 * jax.random.normal(ks[3], (mip,), jnp.float32)
    be1 = 0.1 * jax.random.normal(ks[4], (mip,), jnp.float32)
    m1 = 0.1 * jax.random.normal(ks[5], (mip,), jnp.float32)
    v1 = 1.0 + 0.1 * jnp.abs(jax.random.normal(ks[6], (mip,), jnp.float32))

    w2 = jax.random.normal(ks[7], (C, mip, 1, 1), jnp.float32) * 0.2
    b2 = 0.1 * jax.random.normal(ks[8], (C,), jnp.float32)

    params = (w1, b1, g1, be1, m1, v1, w2, b2)

    # NHWC is the kernel-native layout (no per-op NCHW<->NHWC passes in the hot
    # path); the transposes below belong to the test harness only.
    x_nhwc = jnp.transpose(x_nchw, (0, 2, 3, 1))

    # row_tile=8 -> 2 spatial tiles per image, exercising the tiled grid and the
    # cross-tile x_w accumulation path.
    out_nhwc = coord_att_forward(x_nhwc, *params, row_tile=8)
    out_nhwc = jax.block_until_ready(out_nhwc)
    out_nchw = jnp.transpose(out_nhwc, (0, 3, 1, 2))

    ref = _reference(x_nchw, *params)
    np.testing.assert_allclose(np.asarray(out_nchw), np.asarray(ref),
                               rtol=1e-4, atol=1e-4)

    print("KERNEL_OK")
</pallas_src>

<mosaic_0001>
module attributes {stable_mosaic.version = 11 : i64} {
  func.func @_pool_kernel(%arg0: i32, %arg1: i32, %arg2: memref<1x8x16x16xf32, #tpu.memory_space<vmem>>, %arg3: memref<1x8x16xf32, #tpu.memory_space<vmem>>, %arg4: memref<1x16x16xf32, #tpu.memory_space<vmem>>) attributes {dimension_semantics = [#tpu.dimension_semantics<parallel>, #tpu.dimension_semantics<arbitrary>], iteration_bounds = array<i64: 2, 2>, scalar_prefetch = 0 : i64, scratch_operands = 0 : i64, tpu.core_type = #tpu.core_type<tc>, window_params = [{transform_indices = @transform_0, window_bounds = array<i64: 1, 8, 16, 16>}, {transform_indices = @transform_1, window_bounds = array<i64: 1, 8, 16>}, {transform_indices = @transform_2, window_bounds = array<i64: 1, 16, 16>}]} {
    %c0 = arith.constant 0 : index
    %c0_0 = arith.constant 0 : index
    %c0_1 = arith.constant 0 : index
    %c0_2 = arith.constant 0 : index
    %0 = vector.load %arg2[%c0, %c0_0, %c0_1, %c0_2] : memref<1x8x16x16xf32, #tpu.memory_space<vmem>>, vector<1x8x16x16xf32>
    %1 = vector.shape_cast %0 : vector<1x8x16x16xf32> to vector<8x16x16xf32>
    %cst = arith.constant dense<0.000000e+00> : vector<8x16xf32>
    %2 = vector.multi_reduction <add>, %1, %cst [1] : vector<8x16x16xf32> to vector<8x16xf32>
    %cst_3 = arith.constant 6.250000e-02 : f32
    %3 = vector.broadcast %cst_3 : f32 to vector<8x16xf32>
    %4 = arith.mulf %2, %3 : vector<8x16xf32>
    %c0_4 = arith.constant 0 : index
    %c0_5 = arith.constant 0 : index
    %c0_6 = arith.constant 0 : index
    %5 = vector.load %arg3[%c0_4, %c0_5, %c0_6] : memref<1x8x16xf32, #tpu.memory_space<vmem>>, vector<1x8x16xf32>
    %6 = vector.shape_cast %5 : vector<1x8x16xf32> to vector<8x16xf32>
    %7 = vector.shape_cast %4 : vector<8x16xf32> to vector<1x8x16xf32>
    tpu.vector_store %arg3[%c0_4, %c0_5, %c0_6], %7 {strides = array<i32>} : memref<1x8x16xf32, #tpu.memory_space<vmem>>, vector<1x8x16xf32>,
    %c0_i32 = arith.constant 0 : i32
    %8 = arith.cmpi eq, %arg1, %c0_i32 : i32
    %9 = arith.extui %8 : i1 to i32
    %c0_i32_7 = arith.constant 0 : i32
    %10 = arith.cmpi ne, %9, %c0_i32_7 : i32
    scf.if %10 {
      %cst_16 = arith.constant 0.000000e+00 : f32
      %21 = vector.broadcast %cst_16 : f32 to vector<1x16x16xf32>
      %c0_17 = arith.constant 0 : index
      %c0_18 = arith.constant 0 : index
      %c0_19 = arith.constant 0 : index
      %22 = vector.load %arg4[%c0_17, %c0_18, %c0_19] : memref<1x16x16xf32, #tpu.memory_space<vmem>>, vector<1x16x16xf32>
      tpu.vector_store %arg4[%c0_17, %c0_18, %c0_19], %21 {strides = array<i32>} : memref<1x16x16xf32, #tpu.memory_space<vmem>>, vector<1x16x16xf32>,
    } else {
    }
    %c0_8 = arith.constant 0 : index
    %c0_9 = arith.constant 0 : index
    %c0_10 = arith.constant 0 : index
    %11 = vector.load %arg4[%c0_8, %c0_9, %c0_10] : memref<1x16x16xf32, #tpu.memory_space<vmem>>, vector<1x16x16xf32>
    %12 = vector.shape_cast %11 : vector<1x16x16xf32> to vector<16x16xf32>
    %cst_11 = arith.constant dense<0.000000e+00> : vector<16x16xf32>
    %13 = vector.multi_reduction <add>, %1, %cst_11 [0] : vector<8x16x16xf32> to vector<16x16xf32>
    %14 = arith.addf %12, %13 : vector<16x16xf32>
    %c0_12 = arith.constant 0 : index
    %c0_13 = arith.constant 0 : index
    %c0_14 = arith.constant 0 : index
    %15 = vector.load %arg4[%c0_12, %c0_13, %c0_14] : memref<1x16x16xf32, #tpu.memory_space<vmem>>, vector<1x16x16xf32>
    %16 = vector.shape_cast %15 : vector<1x16x16xf32> to vector<16x16xf32>
    %17 = vector.shape_cast %14 : vector<16x16xf32> to vector<1x16x16xf32>
    tpu.vector_store %arg4[%c0_12, %c0_13, %c0_14], %17 {strides = array<i32>} : memref<1x16x16xf32, #tpu.memory_space<vmem>>, vector<1x16x16xf32>,
    %c1_i32 = arith.constant 1 : i32
    %18 = arith.cmpi eq, %arg1, %c1_i32 : i32
    %19 = arith.extui %18 : i1 to i32
    %c0_i32_15 = arith.constant 0 : i32
    %20 = arith.cmpi ne, %19, %c0_i32_15 : i32
    scf.if %20 {
      %c0_16 = arith.constant 0 : index
      %c0_17 = arith.constant 0 : index
      %c0_18 = arith.constant 0 : index
      %21 = vector.load %arg4[%c0_16, %c0_17, %c0_18] : memref<1x16x16xf32, #tpu.memory_space<vmem>>, vector<1x16x16xf32>
      %22 = vector.shape_cast %21 : vector<1x16x16xf32> to vector<16x16xf32>
      %cst_19 = arith.constant 6.250000e-02 : f32
      %23 = vector.broadcast %cst_19 : f32 to vector<16x16xf32>
      %24 = arith.mulf %22, %23 : vector<16x16xf32>
      %c0_20 = arith.constant 0 : index
      %c0_21 = arith.constant 0 : index
      %c0_22 = arith.constant 0 : index
      %25 = vector.load %arg4[%c0_20, %c0_21, %c0_22] : memref<1x16x16xf32, #tpu.memory_space<vmem>>, vector<1x16x16xf32>
      %26 = vector.shape_cast %25 : vector<1x16x16xf32> to vector<16x16xf32>
      %27 = vector.shape_cast %24 : vector<16x16xf32> to vector<1x16x16xf32>
      tpu.vector_store %arg4[%c0_20, %c0_21, %c0_22], %27 {strides = array<i32>} : memref<1x16x16xf32, #tpu.memory_space<vmem>>, vector<1x16x16xf32>,
    } else {
    }
    return
  }
  func.func @transform_0(%arg0: i32, %arg1: i32) -> (i32, i32, i32, i32) {
    %c0_i32 = arith.constant 0 : i32
    %c0_i32_0 = arith.constant 0 : i32
    %c0_i32_1 = arith.constant 0 : i32
    return %arg0, %arg1, %c0_i32, %c0_i32_0 : i32, i32, i32, i32
  }
  func.func @transform_1(%arg0: i32, %arg1: i32) -> (i32, i32, i32) {
    %c0_i32 = arith.constant 0 : i32
    %c0_i32_0 = arith.constant 0 : i32
    return %arg0, %arg1, %c0_i32 : i32, i32, i32
  }
  func.func @transform_2(%arg0: i32, %arg1: i32) -> (i32, i32, i32) {
    %c0_i32 = arith.constant 0 : i32
    %c0_i32_0 = arith.constant 0 : i32
    %c0_i32_1 = arith.constant 0 : i32
    return %arg0, %c0_i32, %c0_i32_0 : i32, i32, i32
  }
}

</mosaic_0001>

<llo_original>
// kernel: tpu_custom_call.1
$region0: #{tpu_custom_call.1}
  #allocation0 [shape = 'u32[]', space=smem, size = 0x4, offset = 0x4, fixed_abs, tag = 'smem constant byte address 0x4 - core index']
  #allocation1 [shape = 'u32[144,128]{1,0:T(1,128)}', space=vmem, size = 0x12000, scoped, tag = 'internal scratch']
  %s0 = inlined_call_operand.hbm [shape: f32[2,16,16,16], index: 0, kind: input, shape index: {}]
  %s1 = inlined_call_operand.hbm [shape: f32[2,16,16], index: 1, kind: output, shape index: {0}]
  %s2 = inlined_call_operand.hbm [shape: f32[2,16,16], index: 2, kind: output, shape index: {1}]
  %3 = xla_tuple %s1, %s2
  %s4 = sld [smem:[#allocation0]]
  $region57: #{tpu_custom_call.1} parent=0
    _
  %s6 = ssub.s32 1, %s4
  %s7 = scalar_select 0, %s6, %s4
  $region1: #{tpu_custom_call.1} parent=0
    #allocation2 [shape = 'u8[131072]{0}', space=vmem, size = 0x20000, scoped, tag = 'input window, operand 0']
    #allocation3 [shape = 's32[2]{0}', space=sflag, size = 0x8, scoped, tag = 'scoped memory for tpu_custom_call.1']
    #allocation4 [shape = 's32[2]{0}', space=sflag, size = 0x8, scoped, tag = 'scoped memory for tpu_custom_call.1']
    #allocation5 [shape = 'u8[8192]{0}', space=vmem, size = 0x2000, scoped, tag = 'output window, operand 0']
    #allocation6 [shape = 'u8[16384]{0}', space=vmem, size = 0x4000, scoped, tag = 'output window, operand 1']
    #allocation7 [shape = 's32[2]{0}', space=sflag, size = 0x8, scoped, tag = 'scoped memory for tpu_custom_call.1']
    %8 = vsyncpa [#allocation3], 0
    %s9 = scalar_lea.sflag [#allocation3], 1
    %10 = vsyncpa %s9, 0
    %11 = vsyncpa [#allocation4], 0
    %s12 = scalar_lea.sflag [#allocation4], 1
    %13 = vsyncpa %s12, 0
    %14 = vsyncpa [#allocation7], 0
    %s15 = scalar_lea.sflag [#allocation7], 1
    %16 = vsyncpa %s15, 0
    loop: start=0, step=1, limit=6
    $region2: #{tpu_custom_call.1} parent=1 // loop_pre_header
      _
    $region3: #{tpu_custom_call.1} parent=1 // loop_header
      %s18 = sphi 0, %s22
      %p19 = scmp.ge.s32.totalorder %s18, 6
      %s25 = sphi 0, %s37
      %s26 = sphi 0, %s33
      %s27 = sphi 0, %s25
      %s28 = sphi 0, %s26
      %s29 = sphi 0, %s27
      %s30 = sphi 0, %s28
      %s42 = sphi 0, %s44
      %s45 = sphi 0, %s42
      %s46 = sphi 0, %s45
      %s62 = sphi 0, %s46
      %s70 = sphi 0, %s72
      %s73 = sphi 0, %s70
      %s74 = sphi 0, %s73
      %s90 = sphi 0, %s74
      %s96 = sphi 0, %s98
      %s99 = sphi 0, %s96
      %s100 = sphi 0, %s99
      %s116 = sphi 0, %s100
    $region4: #{tpu_custom_call.1} parent=1 // loop_header_branch
      %21 = sbr.rel (%p19) target = $region8
    $region5: #{tpu_custom_call.1} parent=1 // loop_body
      %s23 = ssub.s32 %s18, 1
      %s24 = ssub.s32 %s18, 2
      %s31 = sadd.s32 1, %s26
      %p32 = scmp.ge.s32.totalorder %s31, 2
      %s33 = scalar_select %p32, 0, %s31
      %s34 = sadd.s32 1, %s25
      %s35 = scalar_select %p32, %s34, %s25
      %p36 = scmp.ge.s32.totalorder %s35, 2
      %s37 = scalar_select %p36, 0, %s35
      %s38 = ssub.s32 %s25, %s37
      %s39 = ssub.s32 %s26, %s33
      %s40 = sor.u32 %s38, %s39
      %p41 = scmp.eq.s32.totalorder %s40, 0
      %s43 = sadd.s32 %s42, 1
      %s44 = scalar_select %p41, %s42, %s43
      %p47 = pneg %p41
      %p48 = scmp.eq.s32.totalorder %s18, 3
      %p49 = por %p47, %p48
      %p50 = scmp.ne.s32.totalorder %s42, %s45
      %p51 = scmp.eq.s32.totalorder %s18, 0
      %p52 = por %p50, %p51
      %p53 = scmp.ne.s32.totalorder %s42, %s45
      %p54 = scmp.eq.s32.totalorder %s23, 3
      %p55 = por %p53, %p54
      %p56 = scmp.ne.s32.totalorder %s45, %s46
      %p57 = scmp.eq.s32.totalorder %s23, 0
      %p58 = por %p56, %p57
      %p59 = scmp.ne.s32.totalorder %s45, %s46
      %p60 = scmp.eq.s32.totalorder %s24, 3
      %p61 = por %p59, %p60
      %p63 = scmp.ne.s32.totalorder %s46, %s62
      %p64 = scmp.eq.s32.totalorder %s24, 0
      %p65 = por %p63, %p64
      %s66 = ssub.s32 %s25, %s37
      %s67 = ssub.s32 %s26, %s33
      %s68 = sor.u32 %s66, %s67
      %p69 = scmp.eq.s32.totalorder %s68, 0
      %s71 = sadd.s32 %s70, 1
      %s72 = scalar_select %p69, %s70, %s71
      %p75 = pneg %p69
      %p76 = scmp.eq.s32.totalorder %s18, 3
      %p77 = por %p75, %p76
      %p78 = scmp.ne.s32.totalorder %s70, %s73
      %p79 = scmp.eq.s32.totalorder %s18, 0
      %p80 = por %p78, %p79
      %p81 = scmp.ne.s32.totalorder %s70, %s73
      %p82 = scmp.eq.s32.totalorder %s23, 3
      %p83 = por %p81, %p82
      %p84 = scmp.ne.s32.totalorder %s73, %s74
      %p85 = scmp.eq.s32.totalorder %s23, 0
      %p86 = por %p84, %p85
      %p87 = scmp.ne.s32.totalorder %s73, %s74
      %p88 = scmp.eq.s32.totalorder %s24, 3
      %p89 = por %p87, %p88
      %p91 = scmp.ne.s32.totalorder %s74, %s90
      %p92 = scmp.eq.s32.totalorder %s24, 0
      %p93 = por %p91, %p92
      %s94 = ssub.s32 %s25, %s37
      %p95 = scmp.eq.s32.totalorder %s94, 0
      %s97 = sadd.s32 %s96, 1
      %s98 = scalar_select %p95, %s96, %s97
      %p101 = pneg %p95
      %p102 = scmp.eq.s32.totalorder %s18, 3
      %p103 = por %p101, %p102
      %p104 = scmp.ne.s32.totalorder %s96, %s99
      %p105 = scmp.eq.s32.totalorder %s18, 0
      %p106 = por %p104, %p105
      %p107 = scmp.ne.s32.totalorder %s96, %s99
      %p108 = scmp.eq.s32.totalorder %s23, 3
      %p109 = por %p107, %p108
      %p110 = scmp.ne.s32.totalorder %s99, %s100
      %p111 = scmp.eq.s32.totalorder %s23, 0
      %p112 = por %p110, %p111
      %p113 = scmp.ne.s32.totalorder %s99, %s100
      %p114 = scmp.eq.s32.totalorder %s24, 3
      %p115 = por %p113, %p114
      %p117 = scmp.ne.s32.totalorder %s100, %s116
      %p118 = scmp.eq.s32.totalorder %s24, 0
      %p119 = por %p117, %p118
      %p120 = scmp.le.s32.totalorder 1, %s18
      %p121 = scmp.lt.s32.totalorder %s18, 5
      %p122 = pnand %p120, %p121
      %p123 = pneg %p122
      // Predicated region
      $region9: #{tpu_custom_call.1} parent=5 // pred_check
        _
      $region10: #{tpu_custom_call.1} parent=5 // pred_check_branch
        %125 = sbr.rel (%p122) target = $region12
      $region11: #{tpu_custom_call.1} parent=5 // pred_region
        %s126 = ssub.s32 %s18, 1
      $region12: #{tpu_custom_call.1} parent=5 // pred_fallthru
        _
      %p127 = scmp.lt.s32.totalorder %s18, 4
      // Predicated region
      $region13: #{tpu_custom_call.1} parent=5 // pred_check
        %p128 = pneg %p127
      $region14: #{tpu_custom_call.1} parent=5 // pred_check_branch
        %130 = sbr.rel (%p128) target = $region16
      $region15: #{tpu_custom_call.1} parent=5 // pred_region
        // Predicated region
        $region17: #{tpu_custom_call.1} parent=15 // pred_check
          %p131 = pneg %p52
        $region18: #{tpu_custom_call.1} parent=15 // pred_check_branch
          %133 = sbr.rel (%p131) target = $region20
        $region19: #{tpu_custom_call.1} parent=15 // pred_region
          %s134 = sand.u32 %s42, 1
          %s135 = scalar_lea.sflag [#allocation3], %s134
          %s136 = sand.u32 %s42, 1
          %s137 = smul.addr %s136, 128
          %s138 = scalar_lea.vmem [#allocation2], %s137
          %s139 = smul.u32 8, %s26
          %s141 = ssub.s32 2048, 2048
          %142 = vsyncadd %s135, %s141
          %s143 = smul.addr %s139, 2
          %s144 = smul.addr %s25, 32
          %s145 = sadd.s32 %s143, %s144
          %s146 = smul.addr %s145, 128
          %s147 = scalar_lea.hbm %s0, %s146
          %s148 = sshll.u32 %s138, 4
          %s149 = int_to_ptr.vmem [resolvable:$true] %s148
          %154 = dma.hbm_to_vmem [thread:$0]  %s147, 2048, %s149, %s135, 128, 128, 8
        $region20: #{tpu_custom_call.1} parent=15 // pred_fallthru
          _
      $region16: #{tpu_custom_call.1} parent=5 // pred_fallthru
        _
      %p155 = scmp.le.s32.totalorder 1, %s18
      %p156 = scmp.lt.s32.totalorder %s18, 5
      %p157 = pnand %p155, %p156
      %p158 = pneg %p157
      // Predicated region
      $region21: #{tpu_custom_call.1} parent=5 // pred_check
        _
      $region22: #{tpu_custom_call.1} parent=5 // pred_check_branch
        %160 = sbr.rel (%p157) target = $region24
      $region23: #{tpu_custom_call.1} parent=5 // pred_region
        %s161 = ssub.s32 %s18, 1
        %s162 = sand.u32 %s45, 1
        %s163 = scalar_lea.sflag [#allocation3], %s162
        %s164 = sand.u32 %s45, 1
        %s165 = smul.addr %s164, 128
        %s166 = scalar_lea.vmem [#allocation2], %s165
        // Predicated region
        $region25: #{tpu_custom_call.1} parent=23 // pred_check
          %p167 = pneg %p58
        $region26: #{tpu_custom_call.1} parent=23 // pred_check_branch
          %169 = sbr.rel (%p167) target = $region28
        $region27: #{tpu_custom_call.1} parent=23 // pred_region
          %170 = dma.done %s163, 2048
        $region28: #{tpu_custom_call.1} parent=23 // pred_fallthru
          _
        %s171 = sand.u32 %s45, 1
        %s172 = scalar_lea.sflag [#allocation3], %s171
        %s173 = sand.u32 %s45, 1
        %s174 = smul.addr %s173, 128
        %s175 = scalar_lea.vmem [#allocation2], %s174
        %p176 = pneg %p58
        %p177 = pneg %p55
        %p178 = pneg %p86
        %p179 = pneg %p83
        %s180 = sand.u32 %s73, 1
        %s181 = scalar_lea.sflag [#allocation4], %s180
        %s182 = sand.u32 %s73, 1
        %s183 = smul.addr %s182, 8
        %s184 = scalar_lea.vmem [#allocation5], %s183
        %p185 = pneg %p112
        %p186 = pneg %p109
        %s187 = sand.u32 %s99, 1
        %s188 = scalar_lea.sflag [#allocation7], %s187
        %s189 = sand.u32 %s99, 1
        %s190 = smul.addr %s189, 16
        %s191 = scalar_lea.vmem [#allocation6], %s190
        %s192 = smul.u32 8, %s28
        %v193 = vld [vmem:[%s166] sm:$0xff]
        %v194 = vld [vmem:[%s166 + $0x8] sm:$0xff]
        %v195 = vld [vmem:[%s166 + $0x10] sm:$0xff]
        %v196 = vld [vmem:[%s166 + $0x18] sm:$0xff]
        %v197 = vld [vmem:[%s166 + $0x20] sm:$0xff]
        %v198 = vld [vmem:[%s166 + $0x28] sm:$0xff]
        %v199 = vld [vmem:[%s166 + $0x30] sm:$0xff]
        %v200 = vld [vmem:[%s166 + $0x38] sm:$0xff]
        %v201 = vld [vmem:[%s166 + $0x40] sm:$0xff]
        %v202 = vld [vmem:[%s166 + $0x48] sm:$0xff]
        %v203 = vld [vmem:[%s166 + $0x50] sm:$0xff]
        %v204 = vld [vmem:[%s166 + $0x58] sm:$0xff]
        %v205 = vld [vmem:[%s166 + $0x60] sm:$0xff]
        %v206 = vld [vmem:[%s166 + $0x68] sm:$0xff]
        %v207 = vld [vmem:[%s166 + $0x70] sm:$0xff]
        %v208 = vld [vmem:[%s166 + $0x78] sm:$0xff]
        %vm209 = vcmask 130048
        %v210 = vsel %vm209, %v193, 0.0
        %v211 = vsel %vm209, %v194, 0.0
        %v212 = vadd.f32 %v210, %v211
        %v213 = vrot.slane %v212, 4
        %v214 = vadd.f32 %v212, %v213
        %v215 = vrot.slane %v214, 2
        %v216 = vadd.f32 %v214, %v215
        %v217 = vrot.slane %v216, 1
        %v218 = vadd.f32 %v216, %v217
        %v219 = vsel %vm209, %v195, 0.0
        %v220 = vsel %vm209, %v196, 0.0
        %v221 = vadd.f32 %v219, %v220
        %v222 = vrot.slane %v221, 4
        %v223 = vadd.f32 %v221, %v222
        %v224 = vrot.slane %v223, 2
        %v225 = vadd.f32 %v223, %v224
        %v226 = vrot.slane %v225, 1
        %v227 = vadd.f32 %v225, %v226
        %v228 = vsel %vm209, %v197, 0.0
        %v229 = vsel %vm209, %v198, 0.0
        %v230 = vadd.f32 %v228, %v229
        %v231 = vrot.slane %v230, 4
        %v232 = vadd.f32 %v230, %v231
        %v233 = vrot.slane %v232, 2
        %v234 = vadd.f32 %v232, %v233
        %v235 = vrot.slane %v234, 1
        %v236 = vadd.f32 %v234, %v235
        %v237 = vsel %vm209, %v199, 0.0
        %v238 = vsel %vm209, %v200, 0.0
        %v239 = vadd.f32 %v237, %v238
        %v240 = vrot.slane %v239, 4
        %v241 = vadd.f32 %v239, %v240
        %v242 = vrot.slane %v241, 2
        %v243 = vadd.f32 %v241, %v242
        %v244 = vrot.slane %v243, 1
        %v245 = vadd.f32 %v243, %v244
        %v246 = vsel %vm209, %v201, 0.0
        %v247 = vsel %vm209, %v202, 0.0
        %v248 = vadd.f32 %v246, %v247
        %v249 = vrot.slane %v248, 4
        %v250 = vadd.f32 %v248, %v249
        %v251 = vrot.slane %v250, 2
        %v252 = vadd.f32 %v250, %v251
        %v253 = vrot.slane %v252, 1
        %v254 = vadd.f32 %v252, %v253
        %v255 = vsel %vm209, %v203, 0.0
        %v256 = vsel %vm209, %v204, 0.0
        %v257 = vadd.f32 %v255, %v256
        %v258 = vrot.slane %v257, 4
        %v259 = vadd.f32 %v257, %v258
        %v260 = vrot.slane %v259, 2
        %v261 = vadd.f32 %v259, %v260
        %v262 = vrot.slane %v261, 1
        %v263 = vadd.f32 %v261, %v262
        %v264 = vsel %vm209, %v205, 0.0
        %v265 = vsel %vm209, %v206, 0.0
        %v266 = vadd.f32 %v264, %v265
        %v267 = vrot.slane %v266, 4
        %v268 = vadd.f32 %v266, %v267
        %v269 = vrot.slane %v268, 2
        %v270 = vadd.f32 %v268, %v269
        %v271 = vrot.slane %v270, 1
        %v272 = vadd.f32 %v270, %v271
        %v273 = vsel %vm209, %v207, 0.0
        %v274 = vsel %vm209, %v208, 0.0
        %v275 = vadd.f32 %v273, %v274
        %v276 = vrot.slane %v275, 4
        %v277 = vadd.f32 %v275, %v276
        %v278 = vrot.slane %v277, 2
        %v279 = vadd.f32 %v277, %v278
        %v280 = vrot.slane %v279, 1
        %v281 = vadd.f32 %v279, %v280
        %v282 = vmul.f32 %v218, 0.0625
        %v283 = vmul.f32 %v227, 0.0625
        %v284 = vmul.f32 %v236, 0.0625
        %v285 = vmul.f32 %v245, 0.0625
        %v286 = vmul.f32 %v254, 0.0625
        %v287 = vmul.f32 %v263, 0.0625
        %v288 = vmul.f32 %v272, 0.0625
        %v289 = vmul.f32 %v281, 0.0625
        %vm298 = vcmask 1041409
        %v299 = vsel %vm298, %v283, %v282
        %vm300 = vcmask 1042434
        %v301 = vsel %vm300, %v284, %v299
        %vm302 = vcmask 1043459
        %v303 = vsel %vm302, %v285, %v301
        %vm304 = vcmask 1044484
        %v305 = vsel %vm304, %v286, %v303
        %vm306 = vcmask 1045509
        %v307 = vsel %vm306, %v287, %v305
        %vm308 = vcmask 1046534
        %v309 = vsel %vm308, %v288, %v307
        %vm310 = vcmask 1047559
        %v311 = vsel %vm310, %v289, %v309
        %313 = vst.msk [vmem:[%s184] sm:$0xff] %vm209, %v311
        %p314 = scmp.eq.s32.totalorder %s28, 0
        // Predicated region
        $region29: #{tpu_custom_call.1} parent=23 // pred_check
          %p315 = pneg %p314
        $region30: #{tpu_custom_call.1} parent=23 // pred_check_branch
          %317 = sbr.rel (%p315) target = $region32
        $region31: #{tpu_custom_call.1} parent=23 // pred_region
          %318 = vst.msk [vmem:[%s191] sm:$0xff] %vm209, 0.0
          %319 = vst.msk [vmem:[%s191 + $0x8] sm:$0xff] %vm209, 0.0
        $region32: #{tpu_custom_call.1} parent=23 // pred_fallthru
          _
        %v320 = vld [vmem:[%s191] sm:$0xff]
        %v321 = vld [vmem:[%s191 + $0x8] sm:$0xff]
        %v322 = vadd.f32 %v210, %v219
        %v323 = vadd.f32 %v322, %v228
        %v324 = vadd.f32 %v323, %v237
        %v325 = vadd.f32 %v324, %v246
        %v326 = vadd.f32 %v325, %v255
        %v327 = vadd.f32 %v326, %v264
        %v328 = vadd.f32 %v327, %v273
        %v329 = vadd.f32 %v211, %v220
        %v330 = vadd.f32 %v329, %v229
        %v331 = vadd.f32 %v330, %v238
        %v332 = vadd.f32 %v331, %v247
        %v333 = vadd.f32 %v332, %v256
        %v334 = vadd.f32 %v333, %v265
        %v335 = vadd.f32 %v334, %v274
        %v336 = vadd.f32 %v320, %v328
        %v337 = vadd.f32 %v321, %v335
        %338 = vst.msk [vmem:[%s191] sm:$0xff] %vm209, %v336
        %339 = vst.msk [vmem:[%s191 + $0x8] sm:$0xff] %vm209, %v337
        %p340 = scmp.eq.s32.totalorder %s28, 1
        // Predicated region
        $region33: #{tpu_custom_call.1} parent=23 // pred_check
          %p341 = pneg %p340
        $region34: #{tpu_custom_call.1} parent=23 // pred_check_branch
          %343 = sbr.rel (%p341) target = $region36
        $region35: #{tpu_custom_call.1} parent=23 // pred_region
          %v344 = vld [vmem:[%s191] sm:$0xff]
          %v345 = vld [vmem:[%s191 + $0x8] sm:$0xff]
          %v346 = vmul.f32 %v344, 0.0625
          %v347 = vmul.f32 %v345, 0.0625
          %348 = vst.msk [vmem:[%s191] sm:$0xff] %vm209, %v346
          %349 = vst.msk [vmem:[%s191 + $0x8] sm:$0xff] %vm209, %v347
        $region36: #{tpu_custom_call.1} parent=23 // pred_fallthru
          _
        %s350 = sand.u32 %s73, 1
        %s351 = scalar_lea.sflag [#allocation4], %s350
        %s352 = sand.u32 %s73, 1
        %s353 = smul.addr %s352, 8
        %s354 = scalar_lea.vmem [#allocation5], %s353
        %s355 = sand.u32 %s99, 1
        %s356 = scalar_lea.sflag [#allocation7], %s355
        %s357 = sand.u32 %s99, 1
        %s358 = smul.addr %s357, 16
        %s359 = scalar_lea.vmem [#allocation6], %s358
        // Predicated region
        $region37: #{tpu_custom_call.1} parent=23 // pred_check
          %p360 = pneg %p83
        $region38: #{tpu_custom_call.1} parent=23 // pred_check_branch
          %362 = sbr.rel (%p360) target = $region40
        $region39: #{tpu_custom_call.1} parent=23 // pred_region
          %s364 = ssub.s32 128, 128
          %365 = vsyncadd %s351, %s364
          %s366 = smul.addr %s27, 2
          %s367 = sadd.s32 %s28, %s366
          %s368 = smul.addr %s367, 128
          %s369 = scalar_lea.hbm %s1, %s368
          %s371 = sshll.u32 %s354, 4
          %s372 = int_to_ptr.vmem [resolvable:$true] %s371
          %374 = dma.vmem_to_hbm [thread:$0]  %s372, 128, %s369, %s351
        $region40: #{tpu_custom_call.1} parent=23 // pred_fallthru
          _
        // Predicated region
        $region41: #{tpu_custom_call.1} parent=23 // pred_check
          %p375 = pneg %p109
        $region42: #{tpu_custom_call.1} parent=23 // pred_check_branch
          %377 = sbr.rel (%p375) target = $region44
        $region43: #{tpu_custom_call.1} parent=23 // pred_region
          %s379 = ssub.s32 256, 256
          %380 = vsyncadd %s356, %s379
          %s381 = smul.addr %s27, 2
          %s382 = smul.addr %s381, 128
          %s383 = scalar_lea.hbm %s2, %s382
          %s384 = sshll.u32 %s359, 4
          %s385 = int_to_ptr.vmem [resolvable:$true] %s384
          %390 = dma.vmem_to_hbm [thread:$0]  %s385, 256, %s383, %s356, 128, 128, 8
        $region44: #{tpu_custom_call.1} parent=23 // pred_fallthru
          _
      $region24: #{tpu_custom_call.1} parent=5 // pred_fallthru
        _
      %p391 = scmp.le.s32.totalorder 2, %s18
      // Predicated region
      $region45: #{tpu_custom_call.1} parent=5 // pred_check
        %p392 = pneg %p391
      $region46: #{tpu_custom_call.1} parent=5 // pred_check_branch
        %394 = sbr.rel (%p392) target = $region48
      $region47: #{tpu_custom_call.1} parent=5 // pred_region
        %s395 = ssub.s32 %s18, 2
        // Predicated region
        $region49: #{tpu_custom_call.1} parent=47 // pred_check
          %p396 = pneg %p89
        $region50: #{tpu_custom_call.1} parent=47 // pred_check_branch
          %398 = sbr.rel (%p396) target = $region52
        $region51: #{tpu_custom_call.1} parent=47 // pred_region
          %s399 = sand.u32 %s74, 1
          %s400 = scalar_lea.sflag [#allocation4], %s399
          %s401 = sand.u32 %s74, 1
          %s402 = smul.addr %s401, 8
          %s403 = scalar_lea.vmem [#allocation5], %s402
          %404 = dma.done %s400, 128
        $region52: #{tpu_custom_call.1} parent=47 // pred_fallthru
          _
        // Predicated region
        $region53: #{tpu_custom_call.1} parent=47 // pred_check
          %p405 = pneg %p115
        $region54: #{tpu_custom_call.1} parent=47 // pred_check_branch
          %407 = sbr.rel (%p405) target = $region56
        $region55: #{tpu_custom_call.1} parent=47 // pred_region
          %s408 = sand.u32 %s100, 1
          %s409 = scalar_lea.sflag [#allocation7], %s408
          %s410 = sand.u32 %s100, 1
          %s411 = smul.addr %s410, 16
          %s412 = scalar_lea.vmem [#allocation6], %s411
          %413 = dma.done %s409, 256
        $region56: #{tpu_custom_call.1} parent=47 // pred_fallthru
          _
      $region48: #{tpu_custom_call.1} parent=5 // pred_fallthru
        _
    $region6: #{tpu_custom_call.1} parent=1 // loop_footer
      %s22 = sadd.s32 1, %s18
    $region7: #{tpu_custom_call.1} parent=1 // loop_footer_branch
      %17 = sbr.rel target = $region3
    $region8: #{tpu_custom_call.1} parent=1 // loop_exit
      _
    %414 = vsyncpa [#allocation3], 1
    %s415 = scalar_lea.sflag [#allocation3], 1
    %416 = vsyncpa %s415, 1
    %417 = vsyncpa [#allocation4], 1
    %s418 = scalar_lea.sflag [#allocation4], 1
    %419 = vsyncpa %s418, 1
    %420 = vsyncpa [#allocation7], 1
    %s421 = scalar_lea.sflag [#allocation7], 1
    %422 = vsyncpa %s421, 1

</llo_original>
